<compile_context>
chip_gen: v5e
topology: v5e:2x2
jax: 0.10.0
libtpu: 0.0.40
codegen_flags: <defaults>
</compile_context>

<pallas_src>
import functools

import jax
import jax.numpy as jnp
import numpy as np
from jax.experimental import pallas as pl
from jax.experimental.pallas import tpu as pltpu


def _round_up(x, m):
    return (x + m - 1) // m * m


def _pick_tile(hwp, n, max_tile):
    """Largest multiple of 128 dividing hwp that fits max_tile, preferring a
    choice that yields >= 2 total grid blocks (keeps both v7x TCs busy)."""
    max_tile = max(int(max_tile), 128)
    n128 = hwp // 128
    cands = [d * 128 for d in range(n128, 0, -1)
             if n128 % d == 0 and d * 128 <= max_tile]
    if not cands:
        cands = [128]
    for bm in cands:
        if n * (hwp // bm) >= 2:
            return bm
    return cands[0]


# ------------------------------------------------------------------ kernels
def conv_stats_kernel(at_ref, bt_ref, out_ref, sum_ref, sq_ref):
    """out(1,Cout,bm) = B(Cout,K) @ A(K,bm) on the MXU (bf16 in, f32 acc),
    with per-block BatchNorm lane-partial statistics fused in the epilogue."""
    acc = jnp.dot(bt_ref[...], at_ref[...],
                  preferred_element_type=jnp.float32)          # (Cout, bm) f32
    out_ref[0, :, :] = acc.astype(out_ref.dtype)               # bf16, lane-dense
    # Lane-partial sums: fold bm columns down to 128 lanes with static,
    # lane-aligned slices (VPU adds only; no XLU reduce, no broadcast_to).
    # Zero-padded columns (if any) contribute exactly zero.
    bm = acc.shape[-1]
    s = acc[:, 0:128]
    q = s * s
    for j in range(1, bm // 128):
        blk = acc[:, j * 128:(j + 1) * 128]
        s = s + blk
        q = q + blk * blk
    sum_ref[...] = s                                           # (Cout, 128)
    sq_ref[...] = q                                            # (Cout, 128)


def bn_relu_kernel(x_ref, scale_ref, shift_ref, o_ref):
    """Fused folded-BatchNorm affine + ReLU (per-channel == per-sublane)."""
    x = x_ref[0, :, :].astype(jnp.float32)                     # (Cout, bm2)
    o_ref[0, :, :] = jnp.maximum(x * scale_ref[...] + shift_ref[...], 0.0)


# ------------------------------------------------------------------ wrapper
def conv2d_block(x_nchw, w_oihw, gamma, beta, eps=1e-5,
                 block_m=1024, block_m2=4096, compute_dtype=jnp.bfloat16):
    N, Cin, H, W = x_nchw.shape
    Cout = w_oihw.shape[0]
    K = 9 * Cin
    HW = H * W
    HWp = _round_up(HW, 128)          # per-image padded spatial size (lanes)

    bm = _pick_tile(HWp, N, block_m)          # pass-1 row tile
    tpi = HWp // bm                           # tiles per image (pass 1)
    nb = N * tpi
    bm2 = _pick_tile(HWp, N, block_m2)        # pass-2 row tile (larger ok)
    tpi2 = HWp // bm2

    # ---- glue: im2col patches in transposed (K, N*HWp) layout, bf16 -------
    # Grouped conv with an identity filter copies elements exactly:
    #   patches[ci*9 + ky*3 + kx, n, h, w] = x_pad[n, h+ky, w+kx, ci]
    x_nhwc = jnp.transpose(x_nchw, (0, 2, 3, 1)).astype(compute_dtype)
    eye9 = jnp.eye(9, dtype=compute_dtype).reshape(3, 3, 1, 9)
    patch_filter = jnp.tile(eye9, (1, 1, 1, Cin))              # (3,3,1,9*Cin)
    patches = jax.lax.conv_general_dilated(
        x_nhwc, patch_filter, window_strides=(1, 1), padding=((1, 1), (1, 1)),
        dimension_numbers=("NHWC", "HWIO", "CNHW"),
        feature_group_count=Cin)                               # (K, N, H, W)
    a_t = patches.reshape(K, N, HW)
    if HWp != HW:
        # <128 zero columns per image; zeros contribute nothing to BN sums.
        a_t = jnp.pad(a_t, ((0, 0), (0, 0), (0, HWp - HW)))
    a_t = a_t.reshape(K, N * HWp)
    # Conv weight in the same (ci, ky, kx) contraction order, bf16 for the MXU.
    b_t = w_oihw.reshape(Cout, K).astype(compute_dtype)        # (Cout, K)

    isz = jnp.dtype(compute_dtype).itemsize
    # ---- pass 1: conv matmul (MXU) + fused BN partial statistics ----------
    step1 = 2 * (K * bm * isz + Cout * K * isz + Cout * bm * isz
                 + 2 * Cout * 128 * 4)                # double-buffered footprint
    vmem1 = int(min(48 << 20, max(32 << 20, 4 * step1)))
    cost1 = pl.CostEstimate(
        flops=2 * Cout * K * N * HWp + 3 * Cout * N * HWp,
        transcendentals=0,
        bytes_accessed=(K * N * HWp * isz + Cout * K * isz
                        + Cout * N * HWp * isz + 2 * Cout * nb * 128 * 4))

    conv_t, psum, psq = pl.pallas_call(
        conv_stats_kernel,
        out_shape=(jax.ShapeDtypeStruct((N, Cout, HWp), compute_dtype),
                   jax.ShapeDtypeStruct((Cout, nb * 128), jnp.float32),
                   jax.ShapeDtypeStruct((Cout, nb * 128), jnp.float32)),
        grid=(N, tpi),
        in_specs=[pl.BlockSpec((K, bm), lambda n, t: (0, n * tpi + t)),
                  pl.BlockSpec((Cout, K), lambda n, t: (0, 0))],
        out_specs=(pl.BlockSpec((1, Cout, bm), lambda n, t: (n, 0, t)),
                   pl.BlockSpec((Cout, 128), lambda n, t: (0, n * tpi + t)),
                   pl.BlockSpec((Cout, 128), lambda n, t: (0, n * tpi + t))),
        compiler_params=pltpu.CompilerParams(
            dimension_semantics=("parallel", "parallel"),
            vmem_limit_bytes=vmem1),
        cost_estimate=cost1,
    )(a_t, b_t)

    # ---- glue: fold BN (training-mode biased batch variance) into scale/shift
    cnt = jnp.float32(N * HW)                 # true element count (not padded)
    sums = jnp.sum(psum, axis=1)              # (Cout,)
    sqs = jnp.sum(psq, axis=1)                # (Cout,)
    mean = sums / cnt
    var = jnp.maximum(sqs / cnt - mean * mean, 0.0)
    inv = jax.lax.rsqrt(var + eps)
    g32 = gamma.astype(jnp.float32)
    scale = (g32 * inv).reshape(Cout, 1)
    shift = (beta.astype(jnp.float32) - mean * g32 * inv).reshape(Cout, 1)

    # ---- pass 2: fused BN affine + ReLU, streaming, output already NCHW-flat
    step2 = 2 * (Cout * bm2 * (isz + 4)) + 2 * Cout * 4
    vmem2 = int(min(48 << 20, max(32 << 20, 4 * step2)))
    cost2 = pl.CostEstimate(
        flops=3 * N * Cout * HWp,
        transcendentals=0,
        bytes_accessed=N * Cout * HWp * (isz + 4) + 2 * Cout * 4)

    y3 = pl.pallas_call(
        bn_relu_kernel,
        out_shape=jax.ShapeDtypeStruct((N, Cout, HWp), jnp.float32),
        grid=(N, tpi2),
        in_specs=[pl.BlockSpec((1, Cout, bm2), lambda n, t: (n, 0, t)),
                  pl.BlockSpec((Cout, 1), lambda n, t: (0, 0)),
                  pl.BlockSpec((Cout, 1), lambda n, t: (0, 0))],
        out_specs=pl.BlockSpec((1, Cout, bm2), lambda n, t: (n, 0, t)),
        compiler_params=pltpu.CompilerParams(
            dimension_semantics=("parallel", "parallel"),
            vmem_limit_bytes=vmem2),
        cost_estimate=cost2,
    )(conv_t, scale, shift)

    if HWp != HW:
        y3 = y3[:, :, :HW]
    return y3.reshape(N, Cout, H, W)          # free reshape, no transpose


# ---------------------------------------------------------------- reference
def reference(x, w, gamma, beta, eps=1e-5, compute_dtype=jnp.bfloat16):
    # Same compute precision as the kernel path: bf16 MXU inputs, f32 accum,
    # BN statistics from the f32 conv, and one bf16 round on the conv value
    # that gets normalized (the kernel stores the intermediate in bf16).
    conv = jax.lax.conv_general_dilated(
        x.astype(compute_dtype), w.astype(compute_dtype),
        window_strides=(1, 1), padding=((1, 1), (1, 1)),
        dimension_numbers=("NCHW", "OIHW", "NCHW"),
        preferred_element_type=jnp.float32)
    mean = jnp.mean(conv, axis=(0, 2, 3), keepdims=True)
    var = jnp.mean(jnp.square(conv - mean), axis=(0, 2, 3), keepdims=True)
    conv_q = conv.astype(compute_dtype).astype(jnp.float32)
    y = (conv_q - mean) * jax.lax.rsqrt(var + eps)
    y = y * gamma.reshape(1, -1, 1, 1) + beta.reshape(1, -1, 1, 1)
    return jnp.maximum(y, 0.0)


# --------------------------------------------------------------------- main
if __name__ == "__main__":
    key = jax.random.PRNGKey(0)
    k_x, k_w = jax.random.split(key)

    N, Cin, Cout, H, W = 2, 4, 8, 16, 16
    x = jax.random.normal(k_x, (N, Cin, H, W), dtype=jnp.float32)
    # Conv2d weight (Cout, Cin, 3, 3), bias=False; BN weight=1, bias=0
    w = jax.random.normal(k_w, (Cout, Cin, 3, 3), dtype=jnp.float32) * 0.1
    gamma = jnp.ones((Cout,), dtype=jnp.float32)
    beta = jnp.zeros((Cout,), dtype=jnp.float32)

    fn_big = jax.jit(functools.partial(conv2d_block, block_m=1024))   # 2 blocks
    fn_small = jax.jit(functools.partial(conv2d_block,
                                         block_m=128, block_m2=128))  # 4 blocks

    out = jax.block_until_ready(fn_big(x, w, gamma, beta))
    out_multi = jax.block_until_ready(fn_small(x, w, gamma, beta))

    ref = jax.block_until_ready(reference(x, w, gamma, beta))
    np.testing.assert_allclose(np.asarray(out), np.asarray(ref),
                               rtol=1e-3, atol=1e-3)
    np.testing.assert_allclose(np.asarray(out_multi), np.asarray(ref),
                               rtol=1e-3, atol=1e-3)
    print("KERNEL_OK")
</pallas_src>

<mosaic_0001>
module attributes {stable_mosaic.version = 11 : i64} {
  func.func @conv_stats_kernel(%arg0: i32, %arg1: i32, %arg2: memref<36x256xbf16, #tpu.memory_space<vmem>>, %arg3: memref<8x36xbf16, #tpu.memory_space<vmem>>, %arg4: memref<1x8x256xbf16, #tpu.memory_space<vmem>>, %arg5: memref<8x128xf32, #tpu.memory_space<vmem>>, %arg6: memref<8x128xf32, #tpu.memory_space<vmem>>) attributes {dimension_semantics = [#tpu.dimension_semantics<parallel>, #tpu.dimension_semantics<parallel>], iteration_bounds = array<i64: 2, 1>, scalar_prefetch = 0 : i64, scratch_operands = 0 : i64, tpu.core_type = #tpu.core_type<tc>, window_params = [{transform_indices = @transform_0, window_bounds = array<i64: 36, 256>}, {pipeline_mode = #tpu.pipeline_mode<synchronous>, transform_indices = @transform_1, window_bounds = array<i64: 8, 36>}, {transform_indices = @transform_2, window_bounds = array<i64: 1, 8, 256>}, {transform_indices = @transform_3, window_bounds = array<i64: 8, 128>}, {transform_indices = @transform_4, window_bounds = array<i64: 8, 128>}]} {
    %c0 = arith.constant 0 : index
    %c0_0 = arith.constant 0 : index
    %0 = vector.load %arg3[%c0, %c0_0] : memref<8x36xbf16, #tpu.memory_space<vmem>>, vector<8x36xbf16>
    %c0_1 = arith.constant 0 : index
    %c0_2 = arith.constant 0 : index
    %1 = vector.load %arg2[%c0_1, %c0_2] : memref<36x256xbf16, #tpu.memory_space<vmem>>, vector<36x256xbf16>
    %cst = arith.constant dense<0.000000e+00> : vector<8x256xf32>
    %2 = tpu.matmul %0, %1, %cst {dimension_numbers = #tpu.dot_dimension_numbers<[1], [0], [0], [1], [0, 0, 1, 1], [], []>} : vector<8x36xbf16>, vector<36x256xbf16>, vector<8x256xf32> -> vector<8x256xf32>
    %3 = arith.truncf %2 : vector<8x256xf32> to vector<8x256xbf16>
    %c0_3 = arith.constant 0 : index
    %c0_4 = arith.constant 0 : index
    %c0_5 = arith.constant 0 : index
    %4 = vector.load %arg4[%c0_3, %c0_4, %c0_5] : memref<1x8x256xbf16, #tpu.memory_space<vmem>>, vector<1x8x256xbf16>
    %5 = vector.shape_cast %4 : vector<1x8x256xbf16> to vector<8x256xbf16>
    %6 = vector.shape_cast %3 : vector<8x256xbf16> to vector<1x8x256xbf16>
    tpu.vector_store %arg4[%c0_3, %c0_4, %c0_5], %6 {strides = array<i32>} : memref<1x8x256xbf16, #tpu.memory_space<vmem>>, vector<1x8x256xbf16>,
    %7 = vector.extract_strided_slice %2 {offsets = [0, 0], sizes = [8, 128], strides = [1, 1]} : vector<8x256xf32> to vector<8x128xf32>
    %8 = arith.mulf %7, %7 : vector<8x128xf32>
    %9 = vector.extract_strided_slice %2 {offsets = [0, 128], sizes = [8, 128], strides = [1, 1]} : vector<8x256xf32> to vector<8x128xf32>
    %10 = arith.addf %7, %9 : vector<8x128xf32>
    %11 = arith.mulf %9, %9 : vector<8x128xf32>
    %12 = arith.addf %8, %11 : vector<8x128xf32>
    %c0_6 = arith.constant 0 : index
    %c0_7 = arith.constant 0 : index
    %13 = vector.load %arg5[%c0_6, %c0_7] : memref<8x128xf32, #tpu.memory_space<vmem>>, vector<8x128xf32>
    tpu.vector_store %arg5[%c0_6, %c0_7], %10 {strides = array<i32>} : memref<8x128xf32, #tpu.memory_space<vmem>>, vector<8x128xf32>,
    %c0_8 = arith.constant 0 : index
    %c0_9 = arith.constant 0 : index
    %14 = vector.load %arg6[%c0_8, %c0_9] : memref<8x128xf32, #tpu.memory_space<vmem>>, vector<8x128xf32>
    tpu.vector_store %arg6[%c0_8, %c0_9], %12 {strides = array<i32>} : memref<8x128xf32, #tpu.memory_space<vmem>>, vector<8x128xf32>,
    return
  }
  func.func @transform_0(%arg0: i32, %arg1: i32) -> (i32, i32) {
    %c1_i32 = arith.constant 1 : i32
    %0 = arith.muli %arg0, %c1_i32 : i32
    %1 = arith.addi %0, %arg1 : i32
    %c0_i32 = arith.constant 0 : i32
    %c0_i32_0 = arith.constant 0 : i32
    return %c0_i32, %1 : i32, i32
  }
  func.func @transform_1(%arg0: i32, %arg1: i32) -> (i32, i32) {
    %c0_i32 = arith.constant 0 : i32
    %c0_i32_0 = arith.constant 0 : i32
    %c0_i32_1 = arith.constant 0 : i32
    return %c0_i32, %c0_i32_0 : i32, i32
  }
  func.func @transform_2(%arg0: i32, %arg1: i32) -> (i32, i32, i32) {
    %c0_i32 = arith.constant 0 : i32
    %c0_i32_0 = arith.constant 0 : i32
    return %arg0, %c0_i32, %arg1 : i32, i32, i32
  }
  func.func @transform_3(%arg0: i32, %arg1: i32) -> (i32, i32) {
    %c1_i32 = arith.constant 1 : i32
    %0 = arith.muli %arg0, %c1_i32 : i32
    %1 = arith.addi %0, %arg1 : i32
    %c0_i32 = arith.constant 0 : i32
    %c0_i32_0 = arith.constant 0 : i32
    return %c0_i32, %1 : i32, i32
  }
  func.func @transform_4(%arg0: i32, %arg1: i32) -> (i32, i32) {
    %c1_i32 = arith.constant 1 : i32
    %0 = arith.muli %arg0, %c1_i32 : i32
    %1 = arith.addi %0, %arg1 : i32
    %c0_i32 = arith.constant 0 : i32
    %c0_i32_0 = arith.constant 0 : i32
    return %c0_i32, %1 : i32, i32
  }
}

module attributes {stable_mosaic.version = 11 : i64} {
  func.func @bn_relu_kernel(%arg0: i32, %arg1: i32, %arg2: memref<1x8x256xbf16, #tpu.memory_space<vmem>>, %arg3: memref<8x1xf32, #tpu.memory_space<vmem>>, %arg4: memref<8x1xf32, #tpu.memory_space<vmem>>, %arg5: memref<1x8x256xf32, #tpu.memory_space<vmem>>) attributes {dimension_semantics = [#tpu.dimension_semantics<parallel>, #tpu.dimension_semantics<parallel>], iteration_bounds = array<i64: 2, 1>, scalar_prefetch = 0 : i64, scratch_operands = 0 : i64, tpu.core_type = #tpu.core_type<tc>, window_params = [{transform_indices = @transform_0, window_bounds = array<i64: 1, 8, 256>}, {pipeline_mode = #tpu.pipeline_mode<synchronous>, transform_indices = @transform_1, window_bounds = array<i64: 8, 1>}, {pipeline_mode = #tpu.pipeline_mode<synchronous>, transform_indices = @transform_2, window_bounds = array<i64: 8, 1>}, {transform_indices = @transform_3, window_bounds = array<i64: 1, 8, 256>}]} {
    %c0 = arith.constant 0 : index
    %c0_0 = arith.constant 0 : index
    %c0_1 = arith.constant 0 : index
    %0 = vector.load %arg2[%c0, %c0_0, %c0_1] : memref<1x8x256xbf16, #tpu.memory_space<vmem>>, vector<1x8x256xbf16>
    %1 = vector.shape_cast %0 : vector<1x8x256xbf16> to vector<8x256xbf16>
    %2 = arith.extf %1 : vector<8x256xbf16> to vector<8x256xf32>
    %c0_2 = arith.constant 0 : index
    %c0_3 = arith.constant 0 : index
    %3 = vector.load %arg3[%c0_2, %c0_3] : memref<8x1xf32, #tpu.memory_space<vmem>>, vector<8x1xf32>
    %4 = vector.broadcast %3 : vector<8x1xf32> to vector<8x256xf32>
    %5 = arith.mulf %2, %4 : vector<8x256xf32>
    %c0_4 = arith.constant 0 : index
    %c0_5 = arith.constant 0 : index
    %6 = vector.load %arg4[%c0_4, %c0_5] : memref<8x1xf32, #tpu.memory_space<vmem>>, vector<8x1xf32>
    %7 = vector.broadcast %6 : vector<8x1xf32> to vector<8x256xf32>
    %8 = arith.addf %5, %7 : vector<8x256xf32>
    %cst = arith.constant 0.000000e+00 : f32
    %9 = vector.broadcast %cst : f32 to vector<8x256xf32>
    %10 = arith.maximumf %8, %9 : vector<8x256xf32>
    %c0_6 = arith.constant 0 : index
    %c0_7 = arith.constant 0 : index
    %c0_8 = arith.constant 0 : index
    %11 = vector.load %arg5[%c0_6, %c0_7, %c0_8] : memref<1x8x256xf32, #tpu.memory_space<vmem>>, vector<1x8x256xf32>
    %12 = vector.shape_cast %11 : vector<1x8x256xf32> to vector<8x256xf32>
    %13 = vector.shape_cast %10 : vector<8x256xf32> to vector<1x8x256xf32>
    tpu.vector_store %arg5[%c0_6, %c0_7, %c0_8], %13 {strides = array<i32>} : memref<1x8x256xf32, #tpu.memory_space<vmem>>, vector<1x8x256xf32>,
    return
  }
  func.func @transform_0(%arg0: i32, %arg1: i32) -> (i32, i32, i32) {
    %c0_i32 = arith.constant 0 : i32
    %c0_i32_0 = arith.constant 0 : i32
    return %arg0, %c0_i32, %arg1 : i32, i32, i32
  }
  func.func @transform_1(%arg0: i32, %arg1: i32) -> (i32, i32) {
    %c0_i32 = arith.constant 0 : i32
    %c0_i32_0 = arith.constant 0 : i32
    %c0_i32_1 = arith.constant 0 : i32
    return %c0_i32, %c0_i32_0 : i32, i32
  }
  func.func @transform_2(%arg0: i32, %arg1: i32) -> (i32, i32) {
    %c0_i32 = arith.constant 0 : i32
    %c0_i32_0 = arith.constant 0 : i32
    %c0_i32_1 = arith.constant 0 : i32
    return %c0_i32, %c0_i32_0 : i32, i32
  }
  func.func @transform_3(%arg0: i32, %arg1: i32) -> (i32, i32, i32) {
    %c0_i32 = arith.constant 0 : i32
    %c0_i32_0 = arith.constant 0 : i32
    return %arg0, %c0_i32, %arg1 : i32, i32, i32
  }
}

</mosaic_0001>

<llo_original>
// kernel: conv2d_block.3
$region0: #{conv2d_block.3}
  #allocation0 [shape = 'u32[]', space=smem, size = 0x4, offset = 0x4, fixed_abs, tag = 'smem constant byte address 0x4 - core index']
  #allocation1 [shape = 'u32[72,128]{1,0:T(1,128)}', space=vmem, size = 0x9000, scoped, tag = 'internal scratch']
  %s0 = inlined_call_operand.vmem [shape: bf16[2,8,256], index: 0, kind: input, shape index: {}]
  %s1 = inlined_call_operand.vmem [shape: f32[8,1], index: 1, kind: input, shape index: {}]
  %s2 = inlined_call_operand.vmem [shape: f32[8,1], index: 2, kind: input, shape index: {}]
  %s3 = inlined_call_operand.vmem [shape: f32[2,8,256], index: 3, kind: output, shape index: {}]
  %s4 = sld [smem:[#allocation0]]
  $region45: #{conv2d_block.3} parent=0
    _
  %s6 = ssub.s32 1, %s4
  %s7 = scalar_select 0, %s6, %s4
  loop: start=0, step=1, limit=4
  $region2: #{conv2d_block.3} parent=0 // loop_pre_header
    _
  $region3: #{conv2d_block.3} parent=0 // loop_header
    %s9 = sphi 0, %s13
    %p10 = scmp.ge.s32.totalorder %s9, 4
    %s16 = sphi 0, %s28
    %s17 = sphi 0, %s24
    %s18 = sphi 0, %s16
    %s19 = sphi 0, %s17
    %s20 = sphi 0, %s18
    %s21 = sphi 0, %s19
    %s33 = sphi 0, %s35
    %s36 = sphi 0, %s33
    %s37 = sphi 0, %s36
    %s53 = sphi 0, %s37
    %s57 = sphi 0, %s57
    %s59 = sphi 0, %s57
    %s60 = sphi 0, %s59
    %s74 = sphi 0, %s60
    %s78 = sphi 0, %s78
    %s80 = sphi 0, %s78
    %s81 = sphi 0, %s80
    %s95 = sphi 0, %s81
    %s103 = sphi 0, %s105
    %s106 = sphi 0, %s103
    %s107 = sphi 0, %s106
    %s123 = sphi 0, %s107
  $region4: #{conv2d_block.3} parent=0 // loop_header_branch
    %12 = sbr.rel (%p10) target = $region8
  $region5: #{conv2d_block.3} parent=0 // loop_body
    %s14 = ssub.s32 %s9, 1
    %s15 = ssub.s32 %s9, 2
    %s22 = sadd.s32 1, %s17
    %p23 = scmp.ge.s32.totalorder %s22, 1
    %s24 = scalar_select %p23, 0, %s22
    %s25 = sadd.s32 1, %s16
    %s26 = scalar_select %p23, %s25, %s16
    %p27 = scmp.ge.s32.totalorder %s26, 2
    %s28 = scalar_select %p27, 0, %s26
    %s29 = ssub.s32 %s16, %s28
    %s30 = ssub.s32 %s17, %s24
    %s31 = sor.u32 %s29, %s30
    %p32 = scmp.eq.s32.totalorder %s31, 0
    %s34 = sadd.s32 %s33, 1
    %s35 = scalar_select %p32, %s33, %s34
    %p38 = pneg %p32
    %p39 = scmp.eq.s32.totalorder %s9, 1
    %p40 = por %p38, %p39
    %p41 = scmp.ne.s32.totalorder %s33, %s36
    %p42 = scmp.eq.s32.totalorder %s9, 0
    %p43 = por %p41, %p42
    %p44 = scmp.ne.s32.totalorder %s33, %s36
    %p45 = scmp.eq.s32.totalorder %s14, 1
    %p46 = por %p44, %p45
    %p47 = scmp.ne.s32.totalorder %s36, %s37
    %p48 = scmp.eq.s32.totalorder %s14, 0
    %p49 = por %p47, %p48
    %p50 = scmp.ne.s32.totalorder %s36, %s37
    %p51 = scmp.eq.s32.totalorder %s15, 1
    %p52 = por %p50, %p51
    %p54 = scmp.ne.s32.totalorder %s37, %s53
    %p55 = scmp.eq.s32.totalorder %s15, 0
    %p56 = por %p54, %p55
    %s58 = sadd.s32 %s57, 1
    %p61 = scmp.eq.s32.totalorder %s9, 1
    %p62 = scmp.ne.s32.totalorder %s57, %s59
    %p63 = scmp.eq.s32.totalorder %s9, 0
    %p64 = por %p62, %p63
    %p65 = scmp.ne.s32.totalorder %s57, %s59
    %p66 = scmp.eq.s32.totalorder %s14, 1
    %p67 = por %p65, %p66
    %p68 = scmp.ne.s32.totalorder %s59, %s60
    %p69 = scmp.eq.s32.totalorder %s14, 0
    %p70 = por %p68, %p69
    %p71 = scmp.ne.s32.totalorder %s59, %s60
    %p72 = scmp.eq.s32.totalorder %s15, 1
    %p73 = por %p71, %p72
    %p75 = scmp.ne.s32.totalorder %s60, %s74
    %p76 = scmp.eq.s32.totalorder %s15, 0
    %p77 = por %p75, %p76
    %s79 = sadd.s32 %s78, 1
    %p82 = scmp.eq.s32.totalorder %s9, 1
    %p83 = scmp.ne.s32.totalorder %s78, %s80
    %p84 = scmp.eq.s32.totalorder %s9, 0
    %p85 = por %p83, %p84
    %p86 = scmp.ne.s32.totalorder %s78, %s80
    %p87 = scmp.eq.s32.totalorder %s14, 1
    %p88 = por %p86, %p87
    %p89 = scmp.ne.s32.totalorder %s80, %s81
    %p90 = scmp.eq.s32.totalorder %s14, 0
    %p91 = por %p89, %p90
    %p92 = scmp.ne.s32.totalorder %s80, %s81
    %p93 = scmp.eq.s32.totalorder %s15, 1
    %p94 = por %p92, %p93
    %p96 = scmp.ne.s32.totalorder %s81, %s95
    %p97 = scmp.eq.s32.totalorder %s15, 0
    %p98 = por %p96, %p97
    %s99 = ssub.s32 %s16, %s28
    %s100 = ssub.s32 %s17, %s24
    %s101 = sor.u32 %s99, %s100
    %p102 = scmp.eq.s32.totalorder %s101, 0
    %s104 = sadd.s32 %s103, 1
    %s105 = scalar_select %p102, %s103, %s104
    %p108 = pneg %p102
    %p109 = scmp.eq.s32.totalorder %s9, 1
    %p110 = por %p108, %p109
    %p111 = scmp.ne.s32.totalorder %s103, %s106
    %p112 = scmp.eq.s32.totalorder %s9, 0
    %p113 = por %p111, %p112
    %p114 = scmp.ne.s32.totalorder %s103, %s106
    %p115 = scmp.eq.s32.totalorder %s14, 1
    %p116 = por %p114, %p115
    %p117 = scmp.ne.s32.totalorder %s106, %s107
    %p118 = scmp.eq.s32.totalorder %s14, 0
    %p119 = por %p117, %p118
    %p120 = scmp.ne.s32.totalorder %s106, %s107
    %p121 = scmp.eq.s32.totalorder %s15, 1
    %p122 = por %p120, %p121
    %p124 = scmp.ne.s32.totalorder %s107, %s123
    %p125 = scmp.eq.s32.totalorder %s15, 0
    %p126 = por %p124, %p125
    %p127 = scmp.le.s32.totalorder 1, %s9
    %p128 = scmp.lt.s32.totalorder %s9, 3
    %p129 = pnand %p127, %p128
    %p130 = pneg %p129
    // Predicated region
    $region9: #{conv2d_block.3} parent=5 // pred_check
      _
    $region10: #{conv2d_block.3} parent=5 // pred_check_branch
      %132 = sbr.rel (%p129) target = $region12
    $region11: #{conv2d_block.3} parent=5 // pred_region
      %s133 = ssub.s32 %s9, 1
      // Predicated region
      $region13: #{conv2d_block.3} parent=11 // pred_check
        %p134 = pneg %p70
      $region14: #{conv2d_block.3} parent=11 // pred_check_branch
        %136 = sbr.rel (%p134) target = $region16
      $region15: #{conv2d_block.3} parent=11 // pred_region
        _
      $region16: #{conv2d_block.3} parent=11 // pred_fallthru
        _
      // Predicated region
      $region17: #{conv2d_block.3} parent=11 // pred_check
        %p137 = pneg %p91
      $region18: #{conv2d_block.3} parent=11 // pred_check_branch
        %139 = sbr.rel (%p137) target = $region20
      $region19: #{conv2d_block.3} parent=11 // pred_region
        _
      $region20: #{conv2d_block.3} parent=11 // pred_fallthru
        _
    $region12: #{conv2d_block.3} parent=5 // pred_fallthru
      _
    %p140 = scmp.lt.s32.totalorder %s9, 2
    // Predicated region
    $region21: #{conv2d_block.3} parent=5 // pred_check
      %p141 = pneg %p140
    $region22: #{conv2d_block.3} parent=5 // pred_check_branch
      %143 = sbr.rel (%p141) target = $region24
    $region23: #{conv2d_block.3} parent=5 // pred_region
      // Predicated region
      $region25: #{conv2d_block.3} parent=23 // pred_check
        %p144 = pneg %p43
      $region26: #{conv2d_block.3} parent=23 // pred_check_branch
        %146 = sbr.rel (%p144) target = $region28
      $region27: #{conv2d_block.3} parent=23 // pred_region
        %s147 = smul.u32 2, %s17
        %p148 = scmp.lt.s32.totalorder %s16, 1
        %s149 = scalar_select %p148, %s16, 1
        %p150 = scmp.lt.s32.totalorder %s147, 1
        %s151 = scalar_select %p150, %s147, 1
        %s152 = smul.addr %s149, 2
        %s153 = sadd.s32 %s151, %s152
        %s154 = smul.addr %s153, 4
        %s155 = scalar_lea.vmem %s0, %s154
        %s156 = smul.u32 2, %s17
      $region28: #{conv2d_block.3} parent=23 // pred_fallthru
        _
    $region24: #{conv2d_block.3} parent=5 // pred_fallthru
      _
    %p157 = scmp.le.s32.totalorder 1, %s9
    %p158 = scmp.lt.s32.totalorder %s9, 3
    %p159 = pnand %p157, %p158
    %p160 = pneg %p159
    // Predicated region
    $region29: #{conv2d_block.3} parent=5 // pred_check
      _
    $region30: #{conv2d_block.3} parent=5 // pred_check_branch
      %162 = sbr.rel (%p159) target = $region32
    $region31: #{conv2d_block.3} parent=5 // pred_region
      %s163 = ssub.s32 %s9, 1
      %s164 = smul.u32 2, %s19
      %p165 = scmp.lt.s32.totalorder %s18, 1
      %s166 = scalar_select %p165, %s18, 1
      %p167 = scmp.lt.s32.totalorder %s164, 1
      %s168 = scalar_select %p167, %s164, 1
      %s169 = smul.addr %s166, 2
      %s170 = sadd.s32 %s168, %s169
      %s171 = smul.addr %s170, 4
      %s172 = scalar_lea.vmem %s0, %s171
      %p173 = pneg %p49
      %p174 = pneg %p46
      %p175 = pneg %p70
      %p176 = pneg %p67
      %p177 = pneg %p91
      %p178 = pneg %p88
      %p179 = pneg %p119
      %p180 = pneg %p116
      %s181 = smul.u32 2, %s19
      %p182 = scmp.lt.s32.totalorder %s18, 1
      %s183 = scalar_select %p182, %s18, 1
      %p184 = scmp.lt.s32.totalorder %s181, 1
      %s185 = scalar_select %p184, %s181, 1
      %s186 = smul.addr %s183, 2
      %s187 = sadd.s32 %s185, %s186
      %s188 = smul.addr %s187, 8
      %s189 = scalar_lea.vmem %s3, %s188
      %s190 = smul.u32 2, %s19
      %p191 = scmp.lt.s32.totalorder %s18, 1
      %s192 = scalar_select %p191, %s18, 1
      %p193 = scmp.lt.s32.totalorder %s190, 1
      %s194 = scalar_select %p193, %s190, 1
      %s195 = smul.addr %s192, 2
      %s196 = sadd.s32 %s194, %s195
      %s197 = smul.addr %s196, 4
      %s198 = scalar_lea.vmem %s0, %s197
      %s199 = smul.u32 2, %s19
      %s200 = smul.u32 2, %s19
      %p201 = scmp.lt.s32.totalorder %s18, 1
      %s202 = scalar_select %p201, %s18, 1
      %p203 = scmp.lt.s32.totalorder %s200, 1
      %s204 = scalar_select %p203, %s200, 1
      %s205 = smul.addr %s202, 2
      %s206 = sadd.s32 %s204, %s205
      %s207 = smul.addr %s206, 8
      %s208 = scalar_lea.vmem %s3, %s207
      %s209 = smul.u32 2, %s19
      %v210 = vld [vmem:[%s198] sm:$0xff]
      %v211 = vunpack.c.l.bf16 %v210
      %v212 = vunpack.c.h.bf16 %v210
      %v213 = vld [vmem:[%s1] sm:$0xff]
      %215 = vset.pattern.permute.xlu0 0
      %216 = vperm.xlu0 %215, %v213
      %v217 = vpop.permute.xlu0 %216
      %v219 = vmul.f32 %v211, %v217
      %v220 = vmul.f32 %v212, %v217
      %v221 = vld [vmem:[%s2] sm:$0xff]
      %223 = vset.pattern.permute.xlu0 0
      %224 = vperm.xlu0 %223, %v221
      %v225 = vpop.permute.xlu0 %224
      %v227 = vadd.f32 %v219, %v225
      %v228 = vadd.f32 %v220, %v225
      %v229 = vmax.f32 %v227, 0.0
      %v230 = vmax.f32 %v228, 0.0
      %231 = vst [vmem:[%s208] sm:$0xff] %v229
      %232 = vst [vmem:[%s208 + $0x8] sm:$0xff] %v230
      %s233 = smul.u32 2, %s19
      %p234 = scmp.lt.s32.totalorder %s18, 1
      %s235 = scalar_select %p234, %s18, 1
      %p236 = scmp.lt.s32.totalorder %s233, 1
      %s237 = scalar_select %p236, %s233, 1
      %s238 = smul.addr %s235, 2
      %s239 = sadd.s32 %s237, %s238
      %s240 = smul.addr %s239, 8
      %s241 = scalar_lea.vmem %s3, %s240
      // Predicated region
      $region33: #{conv2d_block.3} parent=31 // pred_check
        %p242 = pneg %p116
      $region34: #{conv2d_block.3} parent=31 // pred_check_branch
        %244 = sbr.rel (%p242) target = $region36
      $region35: #{conv2d_block.3} parent=31 // pred_region
        %s245 = smul.u32 2, %s19
      $region36: #{conv2d_block.3} parent=31 // pred_fallthru
        _
    $region32: #{conv2d_block.3} parent=5 // pred_fallthru
      _
    %p246 = scmp.le.s32.totalorder 2, %s9
    // Predicated region
    $region37: #{conv2d_block.3} parent=5 // pred_check
      %p247 = pneg %p246
    $region38: #{conv2d_block.3} parent=5 // pred_check_branch
      %249 = sbr.rel (%p247) target = $region40
    $region39: #{conv2d_block.3} parent=5 // pred_region
      %s250 = ssub.s32 %s9, 2
      // Predicated region
      $region41: #{conv2d_block.3} parent=39 // pred_check
        %p251 = pneg %p122
      $region42: #{conv2d_block.3} parent=39 // pred_check_branch
        %253 = sbr.rel (%p251) target = $region44
      $region43: #{conv2d_block.3} parent=39 // pred_region
        %s254 = smul.u32 2, %s21
        %p255 = scmp.lt.s32.totalorder %s20, 1
        %s256 = scalar_select %p255, %s20, 1
        %p257 = scmp.lt.s32.totalorder %s254, 1
        %s258 = scalar_select %p257, %s254, 1
        %s259 = smul.addr %s256, 2
        %s260 = sadd.s32 %s258, %s259
        %s261 = smul.addr %s260, 8
        %s262 = scalar_lea.vmem %s3, %s261
      $region44: #{conv2d_block.3} parent=39 // pred_fallthru
        _
    $region40: #{conv2d_block.3} parent=5 // pred_fallthru
      _
  $region6: #{conv2d_block.3} parent=0 // loop_footer
    %s13 = sadd.s32 1, %s9
  $region7: #{conv2d_block.3} parent=0 // loop_footer_branch
    %8 = sbr.rel target = $region3
  $region8: #{conv2d_block.3} parent=0 // loop_exit
    _

// kernel: conv2d_block.2
$region0: #{conv2d_block.2}
  #allocation0 [shape = 'u32[]', space=smem, size = 0x4, offset = 0x4, fixed_abs, tag = 'smem constant byte address 0x4 - core index']
  #allocation1 [shape = 'u32[72,128]{1,0:T(1,128)}', space=vmem, size = 0x9000, scoped, tag = 'internal scratch']
  %s0 = inlined_call_operand.vmem [shape: bf16[36,512], index: 0, kind: input, shape index: {}]
  %s1 = inlined_call_operand.vmem [shape: bf16[8,36], index: 1, kind: input, shape index: {}]
  %s2 = inlined_call_operand.vmem [shape: bf16[2,8,256], index: 2, kind: output, shape index: {0}]
  %s3 = inlined_call_operand.vmem [shape: f32[8,256], index: 3, kind: output, shape index: {1}]
  %s4 = inlined_call_operand.vmem [shape: f32[8,256], index: 4, kind: output, shape index: {2}]
  %5 = xla_tuple %s2, %s3, %s4
  %s6 = sld [smem:[#allocation0]]
  $region95: #{conv2d_block.2} parent=0
    _
  %s8 = ssub.s32 1, %s6
  %s9 = scalar_select 0, %s8, %s6
  $region1: #{conv2d_block.2} parent=0
    #allocation2 [shape = 'u8[40960]{0}', space=vmem, size = 0xa000, scoped, tag = 'input window, operand 0']
    loop: start=0, step=1, limit=4
    $region2: #{conv2d_block.2} parent=1 // loop_pre_header
      _
    $region3: #{conv2d_block.2} parent=1 // loop_header
      %s11 = sphi 0, %s15
      %p12 = scmp.ge.s32.totalorder %s11, 4
      %s18 = sphi 0, %s30
      %s19 = sphi 0, %s26
      %s20 = sphi 0, %s18
      %s21 = sphi 0, %s19
      %s22 = sphi 0, %s20
      %s23 = sphi 0, %s21
      %s35 = sphi 0, %s37
      %s38 = sphi 0, %s35
      %s39 = sphi 0, %s38
      %s55 = sphi 0, %s39
      %s59 = sphi 0, %s59
      %s61 = sphi 0, %s59
      %s62 = sphi 0, %s61
      %s76 = sphi 0, %s62
      %s84 = sphi 0, %s86
      %s87 = sphi 0, %s84
      %s88 = sphi 0, %s87
      %s104 = sphi 0, %s88
      %s112 = sphi 0, %s114
      %s115 = sphi 0, %s112
      %s116 = sphi 0, %s115
      %s132 = sphi 0, %s116
      %s140 = sphi 0, %s142
      %s143 = sphi 0, %s140
      %s144 = sphi 0, %s143
      %s160 = sphi 0, %s144
    $region4: #{conv2d_block.2} parent=1 // loop_header_branch
      %14 = sbr.rel (%p12) target = $region8
    $region5: #{conv2d_block.2} parent=1 // loop_body
      %s16 = ssub.s32 %s11, 1
      %s17 = ssub.s32 %s11, 2
      %s24 = sadd.s32 1, %s19
      %p25 = scmp.ge.s32.totalorder %s24, 1
      %s26 = scalar_select %p25, 0, %s24
      %s27 = sadd.s32 1, %s18
      %s28 = scalar_select %p25, %s27, %s18
      %p29 = scmp.ge.s32.totalorder %s28, 2
      %s30 = scalar_select %p29, 0, %s28
      %s31 = sadd.s32 %s18, %s19
      %s32 = sadd.s32 %s30, %s26
      %s33 = ssub.s32 %s31, %s32
      %p34 = scmp.eq.s32.totalorder %s33, 0
      %s36 = sadd.s32 %s35, 1
      %s37 = scalar_select %p34, %s35, %s36
      %p40 = pneg %p34
      %p41 = scmp.eq.s32.totalorder %s11, 1
      %p42 = por %p40, %p41
      %p43 = scmp.ne.s32.totalorder %s35, %s38
      %p44 = scmp.eq.s32.totalorder %s11, 0
      %p45 = por %p43, %p44
      %p46 = scmp.ne.s32.totalorder %s35, %s38
      %p47 = scmp.eq.s32.totalorder %s16, 1
      %p48 = por %p46, %p47
      %p49 = scmp.ne.s32.totalorder %s38, %s39
      %p50 = scmp.eq.s32.totalorder %s16, 0
      %p51 = por %p49, %p50
      %p52 = scmp.ne.s32.totalorder %s38, %s39
      %p53 = scmp.eq.s32.totalorder %s17, 1
      %p54 = por %p52, %p53
      %p56 = scmp.ne.s32.totalorder %s39, %s55
      %p57 = scmp.eq.s32.totalorder %s17, 0
      %p58 = por %p56, %p57
      %s60 = sadd.s32 %s59, 1
      %p63 = scmp.eq.s32.totalorder %s11, 1
      %p64 = scmp.ne.s32.totalorder %s59, %s61
      %p65 = scmp.eq.s32.totalorder %s11, 0
      %p66 = por %p64, %p65
      %p67 = scmp.ne.s32.totalorder %s59, %s61
      %p68 = scmp.eq.s32.totalorder %s16, 1
      %p69 = por %p67, %p68
      %p70 = scmp.ne.s32.totalorder %s61, %s62
      %p71 = scmp.eq.s32.totalorder %s16, 0
      %p72 = por %p70, %p71
      %p73 = scmp.ne.s32.totalorder %s61, %s62
      %p74 = scmp.eq.s32.totalorder %s17, 1
      %p75 = por %p73, %p74
      %p77 = scmp.ne.s32.totalorder %s62, %s76
      %p78 = scmp.eq.s32.totalorder %s17, 0
      %p79 = por %p77, %p78
      %s80 = ssub.s32 %s18, %s30
      %s81 = ssub.s32 %s19, %s26
      %s82 = sor.u32 %s80, %s81
      %p83 = scmp.eq.s32.totalorder %s82, 0
      %s85 = sadd.s32 %s84, 1
      %s86 = scalar_select %p83, %s84, %s85
      %p89 = pneg %p83
      %p90 = scmp.eq.s32.totalorder %s11, 1
      %p91 = por %p89, %p90
      %p92 = scmp.ne.s32.totalorder %s84, %s87
      %p93 = scmp.eq.s32.totalorder %s11, 0
      %p94 = por %p92, %p93
      %p95 = scmp.ne.s32.totalorder %s84, %s87
      %p96 = scmp.eq.s32.totalorder %s16, 1
      %p97 = por %p95, %p96
      %p98 = scmp.ne.s32.totalorder %s87, %s88
      %p99 = scmp.eq.s32.totalorder %s16, 0
      %p100 = por %p98, %p99
      %p101 = scmp.ne.s32.totalorder %s87, %s88
      %p102 = scmp.eq.s32.totalorder %s17, 1
      %p103 = por %p101, %p102
      %p105 = scmp.ne.s32.totalorder %s88, %s104
      %p106 = scmp.eq.s32.totalorder %s17, 0
      %p107 = por %p105, %p106
      %s108 = sadd.s32 %s18, %s19
      %s109 = sadd.s32 %s30, %s26
      %s110 = ssub.s32 %s108, %s109
      %p111 = scmp.eq.s32.totalorder %s110, 0
      %s113 = sadd.s32 %s112, 1
      %s114 = scalar_select %p111, %s112, %s113
      %p117 = pneg %p111
      %p118 = scmp.eq.s32.totalorder %s11, 1
      %p119 = por %p117, %p118
      %p120 = scmp.ne.s32.totalorder %s112, %s115
      %p121 = scmp.eq.s32.totalorder %s11, 0
      %p122 = por %p120, %p121
      %p123 = scmp.ne.s32.totalorder %s112, %s115
      %p124 = scmp.eq.s32.totalorder %s16, 1
      %p125 = por %p123, %p124
      %p126 = scmp.ne.s32.totalorder %s115, %s116
      %p127 = scmp.eq.s32.totalorder %s16, 0
      %p128 = por %p126, %p127
      %p129 = scmp.ne.s32.totalorder %s115, %s116
      %p130 = scmp.eq.s32.totalorder %s17, 1
      %p131 = por %p129, %p130
      %p133 = scmp.ne.s32.totalorder %s116, %s132
      %p134 = scmp.eq.s32.totalorder %s17, 0
      %p135 = por %p133, %p134
      %s136 = sadd.s32 %s18, %s19
      %s137 = sadd.s32 %s30, %s26
      %s138 = ssub.s32 %s136, %s137
      %p139 = scmp.eq.s32.totalorder %s138, 0
      %s141 = sadd.s32 %s140, 1
      %s142 = scalar_select %p139, %s140, %s141
      %p145 = pneg %p139
      %p146 = scmp.eq.s32.totalorder %s11, 1
      %p147 = por %p145, %p146
      %p148 = scmp.ne.s32.totalorder %s140, %s143
      %p149 = scmp.eq.s32.totalorder %s11, 0
      %p150 = por %p148, %p149
      %p151 = scmp.ne.s32.totalorder %s140, %s143
      %p152 = scmp.eq.s32.totalorder %s16, 1
      %p153 = por %p151, %p152
      %p154 = scmp.ne.s32.totalorder %s143, %s144
      %p155 = scmp.eq.s32.totalorder %s16, 0
      %p156 = por %p154, %p155
      %p157 = scmp.ne.s32.totalorder %s143, %s144
      %p158 = scmp.eq.s32.totalorder %s17, 1
      %p159 = por %p157, %p158
      %p161 = scmp.ne.s32.totalorder %s144, %s160
      %p162 = scmp.eq.s32.totalorder %s17, 0
      %p163 = por %p161, %p162
      %p164 = scmp.le.s32.totalorder 1, %s11
      %p165 = scmp.lt.s32.totalorder %s11, 3
      %p166 = pnand %p164, %p165
      %p167 = pneg %p166
      // Predicated region
      $region9: #{conv2d_block.2} parent=5 // pred_check
        _
      $region10: #{conv2d_block.2} parent=5 // pred_check_branch
        %169 = sbr.rel (%p166) target = $region12
      $region11: #{conv2d_block.2} parent=5 // pred_region
        %s170 = ssub.s32 %s11, 1
        // Predicated region
        $region13: #{conv2d_block.2} parent=11 // pred_check
          %p171 = pneg %p72
        $region14: #{conv2d_block.2} parent=11 // pred_check_branch
          %173 = sbr.rel (%p171) target = $region16
        $region15: #{conv2d_block.2} parent=11 // pred_region
          _
        $region16: #{conv2d_block.2} parent=11 // pred_fallthru
          _
      $region12: #{conv2d_block.2} parent=5 // pred_fallthru
        _
      %p174 = scmp.lt.s32.totalorder %s11, 2
      // Predicated region
      $region17: #{conv2d_block.2} parent=5 // pred_check
        %p175 = pneg %p174
      $region18: #{conv2d_block.2} parent=5 // pred_check_branch
        %177 = sbr.rel (%p175) target = $region20
      $region19: #{conv2d_block.2} parent=5 // pred_region
        // Predicated region
        $region21: #{conv2d_block.2} parent=19 // pred_check
          %p178 = pneg %p45
        $region22: #{conv2d_block.2} parent=19 // pred_check_branch
          %180 = sbr.rel (%p178) target = $region24
        $region23: #{conv2d_block.2} parent=19 // pred_region
          %s181 = sand.u32 %s35, 1
          %s182 = sand.u32 %s35, 1
          %s183 = smul.addr %s182, 40
          %s184 = scalar_lea.vmem [#allocation2], %s183
          %s185 = sadd.s32 %s18, %s19
          %s186 = smul.u32 2, %s185
          %s187 = smul.addr %s186, 4
          %s188 = scalar_lea.vmem %s0, %s187
          // Predicated region
          $region25: #{conv2d_block.2} parent=23 // pred_check
            _
          $region26: #{conv2d_block.2} parent=23 // pred_check_branch
            %190 = sbr.rel (0) target = $region28
          $region27: #{conv2d_block.2} parent=23 // pred_region
            // Predicated region
            $region29: #{conv2d_block.2} parent=27 // pred_check
              _
            $region30: #{conv2d_block.2} parent=27 // pred_check_branch
              %192 = sbr.rel (0) target = $region32
            $region31: #{conv2d_block.2} parent=27 // pred_region
              // Predicated region
              $region44: #{conv2d_block.2} parent=31 // pred_check
                _
              $region45: #{conv2d_block.2} parent=31 // pred_check_branch
                %216 = sbr.rel (0) target = $region47
              $region46: #{conv2d_block.2} parent=31 // pred_region
                loop: start=0, step=1, limit=1
                $region48: #{conv2d_block.2} parent=46 // loop_pre_header
                  _
                $region49: #{conv2d_block.2} parent=46 // loop_header
                  %s218 = sphi 0, %s222
                  %p219 = scmp.ge.s32.totalorder %s218, 1
                  %s223 = sphi %s188, %s188
                  %s224 = sphi %s184, %s184
                $region50: #{conv2d_block.2} parent=46 // loop_header_branch
                  %221 = sbr.rel (%p219) target = $region54
                $region51: #{conv2d_block.2} parent=46 // loop_body
                  %v225 = vld [vmem:[%s223] sm:$0xff]
                  %226 = vst [vmem:[%s224] sm:$0xff] %v225
                  %v227 = vld [vmem:[%s223 + $0x10] sm:$0xff]
                  %228 = vst [vmem:[%s224 + $0x8] sm:$0xff] %v227
                  %v229 = vld [vmem:[%s223 + $0x20] sm:$0xff]
                  %230 = vst [vmem:[%s224 + $0x10] sm:$0xff] %v229
                  %v231 = vld [vmem:[%s223 + $0x30] sm:$0xff]
                  %232 = vst [vmem:[%s224 + $0x18] sm:$0xff] %v231
                  %v233 = vld [vmem:[%s223 + $0x40] sm:$0xff]
                  %234 = vst [vmem:[%s224 + $0x20] sm:$0xff] %v233
                $region52: #{conv2d_block.2} parent=46 // loop_footer
                  %s222 = sadd.s32 1, %s218
                $region53: #{conv2d_block.2} parent=46 // loop_footer_branch
                  %217 = sbr.rel target = $region49
                $region54: #{conv2d_block.2} parent=46 // loop_exit
                  _
              $region47: #{conv2d_block.2} parent=31 // pred_fallthru
                _
              // Predicated region
              $region55: #{conv2d_block.2} parent=31 // pred_check
                _
              $region56: #{conv2d_block.2} parent=31 // pred_check_branch
                %236 = sbr.rel target = $region58
              $region57: #{conv2d_block.2} parent=31 // pred_region
                _
              $region58: #{conv2d_block.2} parent=31 // pred_fallthru
                _
            $region32: #{conv2d_block.2} parent=27 // pred_fallthru
              _
            // Predicated region
            $region33: #{conv2d_block.2} parent=27 // pred_check
              _
            $region34: #{conv2d_block.2} parent=27 // pred_check_branch
              %194 = sbr.rel target = $region36
            $region35: #{conv2d_block.2} parent=27 // pred_region
              %s196 = ssub.s32 256, 1
              loop: start=0, step=1, limit=1
              $region37: #{conv2d_block.2} parent=35 // loop_pre_header
                _
              $region38: #{conv2d_block.2} parent=35 // loop_header
                %s198 = sphi 0, %s202
                %p199 = scmp.ge.s32.totalorder %s198, 1
                %s203 = sphi %s188, %s188
                %s204 = sphi %s184, %s184
              $region39: #{conv2d_block.2} parent=35 // loop_header_branch
                %201 = sbr.rel (%p199) target = $region43
              $region40: #{conv2d_block.2} parent=35 // loop_body
                %v205 = vld [vmem:[%s203] sm:%s196]
                %206 = vst [vmem:[%s204] sm:%s196] %v205
                %v207 = vld [vmem:[%s203 + $0x10] sm:%s196]
                %208 = vst [vmem:[%s204 + $0x8] sm:%s196] %v207
                %v209 = vld [vmem:[%s203 + $0x20] sm:%s196]
                %210 = vst [vmem:[%s204 + $0x10] sm:%s196] %v209
                %v211 = vld [vmem:[%s203 + $0x30] sm:%s196]
                %212 = vst [vmem:[%s204 + $0x18] sm:%s196] %v211
                %v213 = vld [vmem:[%s203 + $0x40] sm:%s196]
                %214 = vst [vmem:[%s204 + $0x20] sm:%s196] %v213
              $region41: #{conv2d_block.2} parent=35 // loop_footer
                %s202 = sadd.s32 1, %s198
              $region42: #{conv2d_block.2} parent=35 // loop_footer_branch
                %197 = sbr.rel target = $region38
              $region43: #{conv2d_block.2} parent=35 // loop_exit
                _
            $region36: #{conv2d_block.2} parent=27 // pred_fallthru
              _
          $region28: #{conv2d_block.2} parent=23 // pred_fallthru
            _
          %237 = vnop
        $region24: #{conv2d_block.2} parent=19 // pred_fallthru
          _
      $region20: #{conv2d_block.2} parent=5 // pred_fallthru
        _
      %p238 = scmp.le.s32.totalorder 1, %s11
      %p239 = scmp.lt.s32.totalorder %s11, 3
      %p240 = pnand %p238, %p239
      %p241 = pneg %p240
      // Predicated region
      $region59: #{conv2d_block.2} parent=5 // pred_check
        _
      $region60: #{conv2d_block.2} parent=5 // pred_check_branch
        %243 = sbr.rel (%p240) target = $region62
      $region61: #{conv2d_block.2} parent=5 // pred_region
        %s244 = ssub.s32 %s11, 1
        %s245 = sand.u32 %s38, 1
        %s246 = sand.u32 %s38, 1
        %s247 = smul.addr %s246, 40
        %s248 = scalar_lea.vmem [#allocation2], %s247
        // Predicated region
        $region63: #{conv2d_block.2} parent=61 // pred_check
          %p249 = pneg %p51
        $region64: #{conv2d_block.2} parent=61 // pred_check_branch
          %251 = sbr.rel (%p249) target = $region66
        $region65: #{conv2d_block.2} parent=61 // pred_region
          _
        $region66: #{conv2d_block.2} parent=61 // pred_fallthru
          _
        %s252 = sand.u32 %s38, 1
        %s253 = sand.u32 %s38, 1
        %s254 = smul.addr %s253, 40
        %s255 = scalar_lea.vmem [#allocation2], %s254
        %p256 = pneg %p51
        %p257 = pneg %p48
        %p258 = pneg %p72
        %p259 = pneg %p69
        %p260 = pneg %p100
        %p261 = pneg %p97
        %s262 = smul.u32 2, %s21
        %p263 = scmp.lt.s32.totalorder %s20, 1
        %s264 = scalar_select %p263, %s20, 1
        %p265 = scmp.lt.s32.totalorder %s262, 1
        %s266 = scalar_select %p265, %s262, 1
        %s267 = smul.addr %s264, 2
        %s268 = sadd.s32 %s266, %s267
        %s269 = smul.addr %s268, 4
        %s270 = scalar_lea.vmem %s2, %s269
        %p271 = pneg %p128
        %p272 = pneg %p125
        %s273 = sadd.s32 %s20, %s21
        %p274 = scmp.lt.s32.totalorder %s273, 1
        %s275 = scalar_select %p274, %s273, 1
        %s276 = smul.addr %s275, 8
        %s277 = scalar_lea.vmem %s3, %s276
        %p278 = pneg %p156
        %p279 = pneg %p153
        %s280 = sadd.s32 %s20, %s21
        %p281 = scmp.lt.s32.totalorder %s280, 1
        %s282 = scalar_select %p281, %s280, 1
        %s283 = smul.addr %s282, 8
        %s284 = scalar_lea.vmem %s4, %s283
        %s285 = sadd.s32 %s20, %s21
        %s286 = smul.u32 2, %s285
        %s287 = smul.u32 2, %s21
        %p288 = scmp.lt.s32.totalorder %s20, 1
        %s289 = scalar_select %p288, %s20, 1
        %p290 = scmp.lt.s32.totalorder %s287, 1
        %s291 = scalar_select %p290, %s287, 1
        %s292 = smul.addr %s289, 2
        %s293 = sadd.s32 %s291, %s292
        %s294 = smul.addr %s293, 4
        %s295 = scalar_lea.vmem %s2, %s294
        %s296 = smul.u32 2, %s21
        %s297 = sadd.s32 %s20, %s21
        %p298 = scmp.lt.s32.totalorder %s297, 1
        %s299 = scalar_select %p298, %s297, 1
        %s300 = smul.addr %s299, 8
        %s301 = scalar_lea.vmem %s3, %s300
        %s302 = sadd.s32 %s20, %s21
        %s303 = sadd.s32 %s20, %s21
        %p304 = scmp.lt.s32.totalorder %s303, 1
        %s305 = scalar_select %p304, %s303, 1
        %s306 = smul.addr %s305, 8
        %s307 = scalar_lea.vmem %s4, %s306
        %s308 = sadd.s32 %s20, %s21
        %v310 = vld [vmem:[%s1] sm:$0xf]
        %v311 = vld [vmem:[%s248] sm:$0xff]
        %v312 = vld [vmem:[%s248 + $0x8] sm:$0xff]
        %v313 = vld [vmem:[%s248 + $0x10] sm:$0xff]
        %v314 = vld [vmem:[%s248 + $0x18] sm:$0xff]
        %v315 = vld [vmem:[%s248 + $0x20] sm:$0x33]
        %v321 = vunpack.c.l.b16 %v311
        %v322 = vunpack.c.h.b16 %v311
        %v323 = vunpack.c.l.b16 %v312
        %v324 = vunpack.c.h.b16 %v312
        %v325 = vunpack.c.l.b16 %v313
        %v326 = vunpack.c.h.b16 %v313
        %v327 = vunpack.c.l.b16 %v314
        %v328 = vunpack.c.h.b16 %v314
        %v329 = vunpack.c.l.b16 %v315
        %v330 = vunpack.c.h.b16 %v315
        %v331 = vpack.c.b16 %v323, %v321
        %v332 = vpack.c.b16 %v324, %v322
        %v333 = vpack.c.b16 %v327, %v325
        %v334 = vpack.c.b16 %v328, %v326
        %v335 = vpack.c.b16 %v329, %v329
        %v336 = vpack.c.b16 %v330, %v330
        %vm341 = vcmask 293888
        %v343 = vsel %vm341, %v310, 0
        %vm345 = vcmask 1041408
        %v347 = vsel %vm345, %v335, 0
        %v350 = vsel %vm345, %v336, 0
        %352 = vmatpush.bf16.msra.mxu0 0
        %353 = vmatpush.bf16.msra.mxu0 0
        %354 = vmatpush.bf16.msra.mxu0 0
        %355 = vmatpush.bf16.msra.mxu0 0
        %356 = vmatpush.bf16.msra.mxu0 0
        %357 = vmatpush.bf16.msra.mxu0 %v347
        %358 = vmatpush.bf16.msra.mxu0 %v333
        %359 = vmatpush.bf16.msra.mxu0 %v331
        %360 = vmatmul.bf16.gmra.mxu0 %v343
        %v361 = vpop.f32.mrf.mxu0
        %v362 = vadd.f32 0.0, %v361
        %v363 = vpop.f32.mrf.mxu0
        %364 = vdwg.mxu0
        %365 = vmatpush.bf16.msra.mxu0 0
        %366 = vmatpush.bf16.msra.mxu0 0
        %367 = vmatpush.bf16.msra.mxu0 0
        %368 = vmatpush.bf16.msra.mxu0 0
        %369 = vmatpush.bf16.msra.mxu0 0
        %370 = vmatpush.bf16.msra.mxu0 %v350
        %371 = vmatpush.bf16.msra.mxu0 %v334
        %372 = vmatpush.bf16.msra.mxu0 %v332
        %373 = vmatmul.bf16.gmra.mxu0 %v343
        %v374 = vpop.f32.mrf.mxu0
        %v375 = vadd.f32 0.0, %v374
        %v376 = vpop.f32.mrf.mxu0
        %377 = vdwg.mxu0
        %v378 = vpack.c.bf16 %v375, %v362
        %379 = vst [vmem:[%s295] sm:$0xff] %v378
        %v380 = vmul.f32 %v362, %v362
        %v381 = vadd.f32 %v362, %v375
        %v382 = vmul.f32 %v375, %v375
        %v383 = vadd.f32 %v380, %v382
        %384 = vst [vmem:[%s301] sm:$0xff] %v381
        %385 = vst [vmem:[%s307] sm:$0xff] %v383
        %s386 = smul.u32 2, %s21
        %p387 = scmp.lt.s32.totalorder %s20, 1
        %s388 = scalar_select %p387, %s20, 1
        %p389 = scmp.lt.s32.totalorder %s386, 1
        %s390 = scalar_select %p389, %s386, 1
        %s391 = smul.addr %s388, 2
        %s392 = sadd.s32 %s390, %s391
        %s393 = smul.addr %s392, 4
        %s394 = scalar_lea.vmem %s2, %s393
        %s395 = sadd.s32 %s20, %s21
        %p396 = scmp.lt.s32.totalorder %s395, 1
        %s397 = scalar_select %p396, %s395, 1
        %s398 = smul.addr %s397, 8
        %s399 = scalar_lea.vmem %s3, %s398
        %s400 = sadd.s32 %s20, %s21
        %p401 = scmp.lt.s32.totalorder %s400, 1
        %s402 = scalar_select %p401, %s400, 1
        %s403 = smul.addr %s402, 8
        %s404 = scalar_lea.vmem %s4, %s403
        // Predicated region
        $region67: #{conv2d_block.2} parent=61 // pred_check
          %p405 = pneg %p97
        $region68: #{conv2d_block.2} parent=61 // pred_check_branch
          %407 = sbr.rel (%p405) target = $region70
        $region69: #{conv2d_block.2} parent=61 // pred_region
          %s408 = smul.u32 2, %s21
        $region70: #{conv2d_block.2} parent=61 // pred_fallthru
          _
        // Predicated region
        $region71: #{conv2d_block.2} parent=61 // pred_check
          %p409 = pneg %p125
        $region72: #{conv2d_block.2} parent=61 // pred_check_branch
          %411 = sbr.rel (%p409) target = $region74
        $region73: #{conv2d_block.2} parent=61 // pred_region
          %s412 = sadd.s32 %s20, %s21
        $region74: #{conv2d_block.2} parent=61 // pred_fallthru
          _
        // Predicated region
        $region75: #{conv2d_block.2} parent=61 // pred_check
          %p413 = pneg %p153
        $region76: #{conv2d_block.2} parent=61 // pred_check_branch
          %415 = sbr.rel (%p413) target = $region78
        $region77: #{conv2d_block.2} parent=61 // pred_region
          %s416 = sadd.s32 %s20, %s21
        $region78: #{conv2d_block.2} parent=61 // pred_fallthru
          _
      $region62: #{conv2d_block.2} parent=5 // pred_fallthru
        _
      %p417 = scmp.le.s32.totalorder 2, %s11
      // Predicated region
      $region79: #{conv2d_block.2} parent=5 // pred_check
        %p418 = pneg %p417
      $region80: #{conv2d_block.2} parent=5 // pred_check_branch
        %420 = sbr.rel (%p418) target = $region82
      $region81: #{conv2d_block.2} parent=5 // pred_region
        %s421 = ssub.s32 %s11, 2
        // Predicated region
        $region83: #{conv2d_block.2} parent=81 // pred_check
          %p422 = pneg %p103
        $region84: #{conv2d_block.2} parent=81 // pred_check_branch
          %424 = sbr.rel (%p422) target = $region86
        $region85: #{conv2d_block.2} parent=81 // pred_region
          %s425 = smul.u32 2, %s23
          %p426 = scmp.lt.s32.totalorder %s22, 1
          %s427 = scalar_select %p426, %s22, 1
          %p428 = scmp.lt.s32.totalorder %s425, 1
          %s429 = scalar_select %p428, %s425, 1
          %s430 = smul.addr %s427, 2
          %s431 = sadd.s32 %s429, %s430
          %s432 = smul.addr %s431, 4
          %s433 = scalar_lea.vmem %s2, %s432
        $region86: #{conv2d_block.2} parent=81 // pred_fallthru
          _
        // Predicated region
        $region87: #{conv2d_block.2} parent=81 // pred_check
          %p434 = pneg %p131
        $region88: #{conv2d_block.2} parent=81 // pred_check_branch
          %436 = sbr.rel (%p434) target = $region90
        $region89: #{conv2d_block.2} parent=81 // pred_region
          %s437 = sadd.s32 %s22, %s23
          %p438 = scmp.lt.s32.totalorder %s437, 1
          %s439 = scalar_select %p438, %s437, 1
          %s440 = smul.addr %s439, 8
          %s441 = scalar_lea.vmem %s3, %s440
        $region90: #{conv2d_block.2} parent=81 // pred_fallthru
          _
        // Predicated region
        $region91: #{conv2d_block.2} parent=81 // pred_check
          %p442 = pneg %p159
        $region92: #{conv2d_block.2} parent=81 // pred_check_branch
          %444 = sbr.rel (%p442) target = $region94
        $region93: #{conv2d_block.2} parent=81 // pred_region
          %s445 = sadd.s32 %s22, %s23
          %p446 = scmp.lt.s32.totalorder %s445, 1
          %s447 = scalar_select %p446, %s445, 1
          %s448 = smul.addr %s447, 8
          %s449 = scalar_lea.vmem %s4, %s448
        $region94: #{conv2d_block.2} parent=81 // pred_fallthru
          _
      $region82: #{conv2d_block.2} parent=5 // pred_fallthru
        _
    $region6: #{conv2d_block.2} parent=1 // loop_footer
      %s15 = sadd.s32 1, %s11
    $region7: #{conv2d_block.2} parent=1 // loop_footer_branch
      %10 = sbr.rel target = $region3
    $region8: #{conv2d_block.2} parent=1 // loop_exit
      _

</llo_original>
